<compile_context>
chip_gen: v5e
topology: v5e:2x2
jax: 0.10.0
libtpu: 0.0.40
codegen_flags: <defaults>
</compile_context>

<pallas_src>
import functools

import jax
import jax.numpy as jnp
from jax import lax
from jax.experimental import pallas as pl
from jax.experimental.pallas import tpu as pltpu


def _bert_layernorm_kernel(x_ref, gamma_ref, beta_ref, o_ref, *, eps):
    """Normalize each batch row of the (Bb, R, C) block over its (R, C) slab.

    gamma_ref / beta_ref are either (1, 1, C) (per-hidden, native layout) or
    (1, R, C) (pre-tiled, flattened lane-dense layout).  Both broadcast
    against the (Bb, R, C) block with the same code.
    """
    x = x_ref[...].astype(jnp.float32)                     # (Bb, R, C)
    n = x.shape[1] * x.shape[2]
    inv_n = jnp.float32(1.0 / n)

    # One sweep over the tile: sum and sum-of-squares, accumulated in f32.
    sum_x = jnp.sum(x, axis=(1, 2), keepdims=True)         # (Bb, 1, 1)
    sum_x2 = jnp.sum(x * x, axis=(1, 2), keepdims=True)    # (Bb, 1, 1)
    u = sum_x * inv_n
    var = jnp.maximum(sum_x2 * inv_n - u * u, 0.0)         # biased variance
    inv = lax.rsqrt(var + eps)                             # (Bb, 1, 1)

    # Fused normalize + affine: out = x * scale + shift.
    scale = gamma_ref[...].astype(jnp.float32) * inv
    shift = beta_ref[...].astype(jnp.float32) - u * scale
    o_ref[...] = (x * scale + shift).astype(o_ref.dtype)


def _pick_block_batch(B, elems_per_row, itemsize):
    """Largest divisor of B whose block fits a conservative VMEM budget."""
    # Per batch row: f32 temporaries (x32, scale, shift) + double-buffered
    # input/output DMA buffers at the native dtype.
    row_bytes = elems_per_row * (3 * 4 + 4 * itemsize)
    budget = 24 * 1024 * 1024
    bb = max(1, min(B, budget // max(row_bytes, 1)))
    if B >= 2:
        bb = min(bb, B // 2)  # keep >=2 grid steps so both v7x TCs get work
    bb = max(1, bb)
    while B % bb:
        bb -= 1
    return bb


def bert_layer_norm(x, gamma, beta, eps=1e-12):
    """x: (B, S, H); gamma, beta: (H,). Returns (B, S, H)."""
    B, S, H = x.shape

    if H % 128 == 0 or (S * H) % 128 != 0:
        # Native layout; lane-dense whenever H is a multiple of 128
        # (true for real BERT hidden sizes 768/1024).
        xr = x
        R, C = S, H
        g = gamma.reshape(1, 1, H)
        b = beta.reshape(1, 1, H)
    else:
        # Small/odd H: flatten each per-batch (S, H) slab into lane-dense
        # rows of 128 so output stores are unmasked full-lane writes.
        C = 128
        R = (S * H) // C
        xr = x.reshape(B, R, C)
        g = jnp.tile(gamma, S).reshape(1, R, C)
        b = jnp.tile(beta, S).reshape(1, R, C)

    itemsize = x.dtype.itemsize
    bb = _pick_block_batch(B, R * C, itemsize)
    grid = (B // bb,)
    # Note: for extremely large per-batch slabs (e.g. S*H*4B approaching the
    # v7x 64 MiB VMEM), an in-body S-chunked two-pass (partial sums, then
    # normalize) would be needed; block sizing above stays well under budget
    # for BERT-scale shapes.

    kernel = functools.partial(_bert_layernorm_kernel, eps=eps)

    cost = pl.CostEstimate(
        flops=6 * B * S * H,
        transcendentals=B,
        bytes_accessed=2 * B * S * H * itemsize
        + (g.size + b.size) * g.dtype.itemsize,
    )

    out = pl.pallas_call(
        kernel,
        out_shape=jax.ShapeDtypeStruct((B, R, C), x.dtype),
        grid=grid,
        in_specs=[
            pl.BlockSpec((bb, R, C), lambda i: (i, 0, 0)),
            pl.BlockSpec(g.shape, lambda i: (0, 0, 0)),
            pl.BlockSpec(b.shape, lambda i: (0, 0, 0)),
        ],
        out_specs=pl.BlockSpec((bb, R, C), lambda i: (i, 0, 0)),
        compiler_params=pltpu.CompilerParams(
            dimension_semantics=("parallel",),
            vmem_limit_bytes=48 * 1024 * 1024,
        ),
        cost_estimate=cost,
    )(xr, g, b)

    return out.reshape(B, S, H)


def bert_layer_norm_ref(x, gamma, beta, eps=1e-12):
    # Pure-JAX reference matching the PyTorch forward exactly (two-pass stats).
    u = jnp.mean(x, axis=(1, 2), keepdims=True)
    s = jnp.mean((x - u) ** 2, axis=(1, 2), keepdims=True)
    xn = (x - u) / jnp.sqrt(s + eps)
    return gamma * xn + beta


if __name__ == "__main__":
    B, S, H = 2, 8, 32
    key = jax.random.PRNGKey(0)
    x = jax.random.normal(key, (B, S, H), dtype=jnp.float32)

    # Deterministic parameter init matching nn.Parameter(torch.ones/zeros(hidden_size))
    gamma = jnp.ones((H,), dtype=jnp.float32)
    beta = jnp.zeros((H,), dtype=jnp.float32)

    out = bert_layer_norm(x, gamma, beta)
    out = jax.block_until_ready(out)

    ref = bert_layer_norm_ref(x, gamma, beta)
    assert out.shape == (B, S, H)
    assert jnp.allclose(out, ref, atol=1e-5, rtol=1e-5), "mismatch vs reference"

    print("KERNEL_OK")
</pallas_src>

<mosaic_0001>
module attributes {stable_mosaic.version = 11 : i64} {
  func.func @_bert_layernorm_kernel(%arg0: i32, %arg1: memref<1x2x128xf32, #tpu.memory_space<vmem>>, %arg2: memref<1x2x128xf32, #tpu.memory_space<vmem>>, %arg3: memref<1x2x128xf32, #tpu.memory_space<vmem>>, %arg4: memref<1x2x128xf32, #tpu.memory_space<vmem>>) attributes {dimension_semantics = [#tpu.dimension_semantics<parallel>], iteration_bounds = array<i64: 2>, scalar_prefetch = 0 : i64, scratch_operands = 0 : i64, tpu.core_type = #tpu.core_type<tc>, window_params = [{transform_indices = @transform_0, window_bounds = array<i64: 1, 2, 128>}, {pipeline_mode = #tpu.pipeline_mode<synchronous>, transform_indices = @transform_1, window_bounds = array<i64: 1, 2, 128>}, {pipeline_mode = #tpu.pipeline_mode<synchronous>, transform_indices = @transform_2, window_bounds = array<i64: 1, 2, 128>}, {transform_indices = @transform_3, window_bounds = array<i64: 1, 2, 128>}]} {
    %c0 = arith.constant 0 : index
    %c0_0 = arith.constant 0 : index
    %c0_1 = arith.constant 0 : index
    %0 = vector.load %arg1[%c0, %c0_0, %c0_1] : memref<1x2x128xf32, #tpu.memory_space<vmem>>, vector<1x2x128xf32>
    %cst = arith.constant dense<0.000000e+00> : vector<1xf32>
    %1 = vector.multi_reduction <add>, %0, %cst [1, 2] : vector<1x2x128xf32> to vector<1xf32>
    %2 = vector.shape_cast %1 : vector<1xf32> to vector<1x1x1xf32>
    %3 = arith.mulf %0, %0 : vector<1x2x128xf32>
    %cst_2 = arith.constant dense<0.000000e+00> : vector<1xf32>
    %4 = vector.multi_reduction <add>, %3, %cst_2 [1, 2] : vector<1x2x128xf32> to vector<1xf32>
    %5 = vector.shape_cast %4 : vector<1xf32> to vector<1x1x1xf32>
    %cst_3 = arith.constant 3.906250e-03 : f32
    %6 = vector.broadcast %cst_3 : f32 to vector<1x1x1xf32>
    %7 = arith.mulf %2, %6 : vector<1x1x1xf32>
    %cst_4 = arith.constant 3.906250e-03 : f32
    %8 = vector.broadcast %cst_4 : f32 to vector<1x1x1xf32>
    %9 = arith.mulf %5, %8 : vector<1x1x1xf32>
    %10 = arith.mulf %7, %7 : vector<1x1x1xf32>
    %11 = arith.subf %9, %10 : vector<1x1x1xf32>
    %cst_5 = arith.constant 0.000000e+00 : f32
    %12 = vector.broadcast %cst_5 : f32 to vector<1x1x1xf32>
    %13 = arith.maximumf %11, %12 : vector<1x1x1xf32>
    %cst_6 = arith.constant 9.99999996E-13 : f32
    %14 = vector.broadcast %cst_6 : f32 to vector<1x1x1xf32>
    %15 = arith.addf %13, %14 : vector<1x1x1xf32>
    %16 = math.rsqrt %15 : vector<1x1x1xf32>
    %c0_7 = arith.constant 0 : index
    %c0_8 = arith.constant 0 : index
    %c0_9 = arith.constant 0 : index
    %17 = vector.load %arg2[%c0_7, %c0_8, %c0_9] : memref<1x2x128xf32, #tpu.memory_space<vmem>>, vector<1x2x128xf32>
    %18 = vector.broadcast %16 : vector<1x1x1xf32> to vector<1x2x128xf32>
    %19 = arith.mulf %17, %18 : vector<1x2x128xf32>
    %c0_10 = arith.constant 0 : index
    %c0_11 = arith.constant 0 : index
    %c0_12 = arith.constant 0 : index
    %20 = vector.load %arg3[%c0_10, %c0_11, %c0_12] : memref<1x2x128xf32, #tpu.memory_space<vmem>>, vector<1x2x128xf32>
    %21 = vector.broadcast %7 : vector<1x1x1xf32> to vector<1x2x128xf32>
    %22 = arith.mulf %21, %19 : vector<1x2x128xf32>
    %23 = arith.subf %20, %22 : vector<1x2x128xf32>
    %24 = arith.mulf %0, %19 : vector<1x2x128xf32>
    %25 = arith.addf %24, %23 : vector<1x2x128xf32>
    %c0_13 = arith.constant 0 : index
    %c0_14 = arith.constant 0 : index
    %c0_15 = arith.constant 0 : index
    %26 = vector.load %arg4[%c0_13, %c0_14, %c0_15] : memref<1x2x128xf32, #tpu.memory_space<vmem>>, vector<1x2x128xf32>
    tpu.vector_store %arg4[%c0_13, %c0_14, %c0_15], %25 {strides = array<i32>} : memref<1x2x128xf32, #tpu.memory_space<vmem>>, vector<1x2x128xf32>,
    return
  }
  func.func @transform_0(%arg0: i32) -> (i32, i32, i32) {
    %c0_i32 = arith.constant 0 : i32
    %c0_i32_0 = arith.constant 0 : i32
    %c0_i32_1 = arith.constant 0 : i32
    return %arg0, %c0_i32, %c0_i32_0 : i32, i32, i32
  }
  func.func @transform_1(%arg0: i32) -> (i32, i32, i32) {
    %c0_i32 = arith.constant 0 : i32
    %c0_i32_0 = arith.constant 0 : i32
    %c0_i32_1 = arith.constant 0 : i32
    %c0_i32_2 = arith.constant 0 : i32
    return %c0_i32, %c0_i32_0, %c0_i32_1 : i32, i32, i32
  }
  func.func @transform_2(%arg0: i32) -> (i32, i32, i32) {
    %c0_i32 = arith.constant 0 : i32
    %c0_i32_0 = arith.constant 0 : i32
    %c0_i32_1 = arith.constant 0 : i32
    %c0_i32_2 = arith.constant 0 : i32
    return %c0_i32, %c0_i32_0, %c0_i32_1 : i32, i32, i32
  }
  func.func @transform_3(%arg0: i32) -> (i32, i32, i32) {
    %c0_i32 = arith.constant 0 : i32
    %c0_i32_0 = arith.constant 0 : i32
    %c0_i32_1 = arith.constant 0 : i32
    return %arg0, %c0_i32, %c0_i32_0 : i32, i32, i32
  }
}

</mosaic_0001>

<llo_original>
// kernel: tpu_custom_call.1
$region0: #{tpu_custom_call.1}
  #allocation0 [shape = 'u32[]', space=smem, size = 0x4, offset = 0x4, fixed_abs, tag = 'smem constant byte address 0x4 - core index']
  #allocation1 [shape = 'u32[72,128]{1,0:T(1,128)}', space=vmem, size = 0x9000, scoped, tag = 'internal scratch']
  %s0 = inlined_call_operand.hbm [shape: f32[2,2,128], index: 0, kind: input, shape index: {}]
  %s1 = inlined_call_operand.hbm [shape: f32[1,2,128], index: 1, kind: input, shape index: {}]
  %s2 = inlined_call_operand.hbm [shape: f32[1,2,128], index: 2, kind: input, shape index: {}]
  %s3 = inlined_call_operand.hbm [shape: f32[2,2,128], index: 3, kind: output, shape index: {}]
  %s4 = sld [smem:[#allocation0]]
  $region57: #{tpu_custom_call.1} parent=0
    _
  %s6 = ssub.s32 1, %s4
  %s7 = scalar_select 0, %s6, %s4
  $region1: #{tpu_custom_call.1} parent=0
    #allocation2 [shape = 'u8[2048]{0}', space=vmem, size = 0x800, scoped, tag = 'input window, operand 0']
    #allocation3 [shape = 's32[2]{0}', space=sflag, size = 0x8, scoped, tag = 'scoped memory for tpu_custom_call.1']
    #allocation4 [shape = 's32[2]{0}', space=sflag, size = 0x8, scoped, tag = 'scoped memory for tpu_custom_call.1']
    #allocation5 [shape = 'u8[1024]{0}', space=vmem, size = 0x400, scoped, tag = 'input window, operand 1, single buffered']
    #allocation6 [shape = 's32[1]{0}', space=sflag, size = 0x4, scoped, tag = 'scoped memory for tpu_custom_call.1']
    #allocation7 [shape = 'u8[1024]{0}', space=vmem, size = 0x400, scoped, tag = 'input window, operand 2, single buffered']
    #allocation8 [shape = 'u8[2048]{0}', space=vmem, size = 0x800, scoped, tag = 'output window, operand 0']
    %8 = vsyncpa [#allocation3], 0
    %s9 = scalar_lea.sflag [#allocation3], 1
    %10 = vsyncpa %s9, 0
    %11 = vsyncpa [#allocation6], 0
    %12 = vsyncpa [#allocation4], 0
    %s13 = scalar_lea.sflag [#allocation4], 1
    %14 = vsyncpa %s13, 0
    loop: start=0, step=1, limit=4
    $region2: #{tpu_custom_call.1} parent=1 // loop_pre_header
      _
    $region3: #{tpu_custom_call.1} parent=1 // loop_header
      %s16 = sphi 0, %s20
      %p17 = scmp.ge.s32.totalorder %s16, 4
      %s26 = sphi 0, %s28
      %s29 = sphi 0, %s26
      %s30 = sphi 0, %s29
      %s46 = sphi 0, %s30
      %s50 = sphi 0, %s50
      %s52 = sphi 0, %s50
      %s53 = sphi 0, %s52
      %s67 = sphi 0, %s53
      %s71 = sphi 0, %s71
      %s73 = sphi 0, %s71
      %s74 = sphi 0, %s73
      %s88 = sphi 0, %s74
      %s94 = sphi 0, %s96
      %s97 = sphi 0, %s94
      %s98 = sphi 0, %s97
      %s114 = sphi 0, %s98
    $region4: #{tpu_custom_call.1} parent=1 // loop_header_branch
      %19 = sbr.rel (%p17) target = $region8
    $region5: #{tpu_custom_call.1} parent=1 // loop_body
      %s21 = ssub.s32 %s16, 1
      %s22 = ssub.s32 %s16, 2
      %s23 = sadd.s32 %s16, 1
      %s24 = ssub.s32 %s16, %s23
      %p25 = scmp.eq.s32.totalorder %s24, 0
      %s27 = sadd.s32 %s26, 1
      %s28 = scalar_select %p25, %s26, %s27
      %p31 = pneg %p25
      %p32 = scmp.eq.s32.totalorder %s16, 1
      %p33 = por %p31, %p32
      %p34 = scmp.ne.s32.totalorder %s26, %s29
      %p35 = scmp.eq.s32.totalorder %s16, 0
      %p36 = por %p34, %p35
      %p37 = scmp.ne.s32.totalorder %s26, %s29
      %p38 = scmp.eq.s32.totalorder %s21, 1
      %p39 = por %p37, %p38
      %p40 = scmp.ne.s32.totalorder %s29, %s30
      %p41 = scmp.eq.s32.totalorder %s21, 0
      %p42 = por %p40, %p41
      %p43 = scmp.ne.s32.totalorder %s29, %s30
      %p44 = scmp.eq.s32.totalorder %s22, 1
      %p45 = por %p43, %p44
      %p47 = scmp.ne.s32.totalorder %s30, %s46
      %p48 = scmp.eq.s32.totalorder %s22, 0
      %p49 = por %p47, %p48
      %s51 = sadd.s32 %s50, 1
      %p54 = scmp.eq.s32.totalorder %s16, 1
      %p55 = scmp.ne.s32.totalorder %s50, %s52
      %p56 = scmp.eq.s32.totalorder %s16, 0
      %p57 = por %p55, %p56
      %p58 = scmp.ne.s32.totalorder %s50, %s52
      %p59 = scmp.eq.s32.totalorder %s21, 1
      %p60 = por %p58, %p59
      %p61 = scmp.ne.s32.totalorder %s52, %s53
      %p62 = scmp.eq.s32.totalorder %s21, 0
      %p63 = por %p61, %p62
      %p64 = scmp.ne.s32.totalorder %s52, %s53
      %p65 = scmp.eq.s32.totalorder %s22, 1
      %p66 = por %p64, %p65
      %p68 = scmp.ne.s32.totalorder %s53, %s67
      %p69 = scmp.eq.s32.totalorder %s22, 0
      %p70 = por %p68, %p69
      %s72 = sadd.s32 %s71, 1
      %p75 = scmp.eq.s32.totalorder %s16, 1
      %p76 = scmp.ne.s32.totalorder %s71, %s73
      %p77 = scmp.eq.s32.totalorder %s16, 0
      %p78 = por %p76, %p77
      %p79 = scmp.ne.s32.totalorder %s71, %s73
      %p80 = scmp.eq.s32.totalorder %s21, 1
      %p81 = por %p79, %p80
      %p82 = scmp.ne.s32.totalorder %s73, %s74
      %p83 = scmp.eq.s32.totalorder %s21, 0
      %p84 = por %p82, %p83
      %p85 = scmp.ne.s32.totalorder %s73, %s74
      %p86 = scmp.eq.s32.totalorder %s22, 1
      %p87 = por %p85, %p86
      %p89 = scmp.ne.s32.totalorder %s74, %s88
      %p90 = scmp.eq.s32.totalorder %s22, 0
      %p91 = por %p89, %p90
      %s92 = ssub.s32 %s16, %s23
      %p93 = scmp.eq.s32.totalorder %s92, 0
      %s95 = sadd.s32 %s94, 1
      %s96 = scalar_select %p93, %s94, %s95
      %p99 = pneg %p93
      %p100 = scmp.eq.s32.totalorder %s16, 1
      %p101 = por %p99, %p100
      %p102 = scmp.ne.s32.totalorder %s94, %s97
      %p103 = scmp.eq.s32.totalorder %s16, 0
      %p104 = por %p102, %p103
      %p105 = scmp.ne.s32.totalorder %s94, %s97
      %p106 = scmp.eq.s32.totalorder %s21, 1
      %p107 = por %p105, %p106
      %p108 = scmp.ne.s32.totalorder %s97, %s98
      %p109 = scmp.eq.s32.totalorder %s21, 0
      %p110 = por %p108, %p109
      %p111 = scmp.ne.s32.totalorder %s97, %s98
      %p112 = scmp.eq.s32.totalorder %s22, 1
      %p113 = por %p111, %p112
      %p115 = scmp.ne.s32.totalorder %s98, %s114
      %p116 = scmp.eq.s32.totalorder %s22, 0
      %p117 = por %p115, %p116
      %p118 = scmp.le.s32.totalorder 1, %s16
      %p119 = scmp.lt.s32.totalorder %s16, 3
      %p120 = pnand %p118, %p119
      %p121 = pneg %p120
      // Predicated region
      $region9: #{tpu_custom_call.1} parent=5 // pred_check
        _
      $region10: #{tpu_custom_call.1} parent=5 // pred_check_branch
        %123 = sbr.rel (%p120) target = $region12
      $region11: #{tpu_custom_call.1} parent=5 // pred_region
        %s124 = ssub.s32 %s16, 1
        // Predicated region
        $region13: #{tpu_custom_call.1} parent=11 // pred_check
          %p125 = pneg %p63
        $region14: #{tpu_custom_call.1} parent=11 // pred_check_branch
          %127 = sbr.rel (%p125) target = $region16
        $region15: #{tpu_custom_call.1} parent=11 // pred_region
          %129 = vsyncadd [#allocation6], 0
          %s131 = sshll.u32 %s1, 4
          %s132 = int_to_ptr.hbm [resolvable:$true] %s131
          %s133 = sshll.u32 [#allocation5], 4
          %s134 = int_to_ptr.vmem [resolvable:$true] %s133
          %136 = dma.hbm_to_vmem [thread:$0]  %s132, 32, %s134, [#allocation6]
        $region16: #{tpu_custom_call.1} parent=11 // pred_fallthru
          _
        // Predicated region
        $region17: #{tpu_custom_call.1} parent=11 // pred_check
          %p137 = pneg %p84
        $region18: #{tpu_custom_call.1} parent=11 // pred_check_branch
          %139 = sbr.rel (%p137) target = $region20
        $region19: #{tpu_custom_call.1} parent=11 // pred_region
          %141 = vsyncadd [#allocation6], 0
          %s143 = sshll.u32 %s2, 4
          %s144 = int_to_ptr.hbm [resolvable:$true] %s143
          %s145 = sshll.u32 [#allocation7], 4
          %s146 = int_to_ptr.vmem [resolvable:$true] %s145
          %148 = dma.hbm_to_vmem [thread:$0]  %s144, 32, %s146, [#allocation6]
        $region20: #{tpu_custom_call.1} parent=11 // pred_fallthru
          _
      $region12: #{tpu_custom_call.1} parent=5 // pred_fallthru
        _
      %p149 = scmp.lt.s32.totalorder %s16, 2
      // Predicated region
      $region21: #{tpu_custom_call.1} parent=5 // pred_check
        %p150 = pneg %p149
      $region22: #{tpu_custom_call.1} parent=5 // pred_check_branch
        %152 = sbr.rel (%p150) target = $region24
      $region23: #{tpu_custom_call.1} parent=5 // pred_region
        // Predicated region
        $region25: #{tpu_custom_call.1} parent=23 // pred_check
          %p153 = pneg %p36
        $region26: #{tpu_custom_call.1} parent=23 // pred_check_branch
          %155 = sbr.rel (%p153) target = $region28
        $region27: #{tpu_custom_call.1} parent=23 // pred_region
          %s156 = sand.u32 %s26, 1
          %s157 = scalar_lea.sflag [#allocation3], %s156
          %s158 = sand.u32 %s26, 1
          %s159 = smul.addr %s158, 2
          %s160 = scalar_lea.vmem [#allocation2], %s159
          %162 = vsyncadd %s157, 0
          %s163 = smul.addr %s16, 2
          %s164 = scalar_lea.hbm %s0, %s163
          %s166 = sshll.u32 %s164, 4
          %s167 = int_to_ptr.hbm [resolvable:$true] %s166
          %s168 = sshll.u32 %s160, 4
          %s169 = int_to_ptr.vmem [resolvable:$true] %s168
          %171 = dma.hbm_to_vmem [thread:$0]  %s167, 32, %s169, %s157
        $region28: #{tpu_custom_call.1} parent=23 // pred_fallthru
          _
      $region24: #{tpu_custom_call.1} parent=5 // pred_fallthru
        _
      %p172 = scmp.le.s32.totalorder 1, %s16
      %p173 = scmp.lt.s32.totalorder %s16, 3
      %p174 = pnand %p172, %p173
      %p175 = pneg %p174
      // Predicated region
      $region29: #{tpu_custom_call.1} parent=5 // pred_check
        _
      $region30: #{tpu_custom_call.1} parent=5 // pred_check_branch
        %177 = sbr.rel (%p174) target = $region32
      $region31: #{tpu_custom_call.1} parent=5 // pred_region
        %s178 = ssub.s32 %s16, 1
        %s179 = sand.u32 %s29, 1
        %s180 = scalar_lea.sflag [#allocation3], %s179
        %s181 = sand.u32 %s29, 1
        %s182 = smul.addr %s181, 2
        %s183 = scalar_lea.vmem [#allocation2], %s182
        // Predicated region
        $region33: #{tpu_custom_call.1} parent=31 // pred_check
          %p184 = pneg %p42
        $region34: #{tpu_custom_call.1} parent=31 // pred_check_branch
          %186 = sbr.rel (%p184) target = $region36
        $region35: #{tpu_custom_call.1} parent=31 // pred_region
          %188 = dma.done %s180, 32
        $region36: #{tpu_custom_call.1} parent=31 // pred_fallthru
          _
        // Predicated region
        $region37: #{tpu_custom_call.1} parent=31 // pred_check
          %p189 = pneg %p63
        $region38: #{tpu_custom_call.1} parent=31 // pred_check_branch
          %191 = sbr.rel (%p189) target = $region40
        $region39: #{tpu_custom_call.1} parent=31 // pred_region
          %193 = dma.done [#allocation6], 32
        $region40: #{tpu_custom_call.1} parent=31 // pred_fallthru
          _
        // Predicated region
        $region41: #{tpu_custom_call.1} parent=31 // pred_check
          %p194 = pneg %p84
        $region42: #{tpu_custom_call.1} parent=31 // pred_check_branch
          %196 = sbr.rel (%p194) target = $region44
        $region43: #{tpu_custom_call.1} parent=31 // pred_region
          %198 = dma.done [#allocation6], 32
        $region44: #{tpu_custom_call.1} parent=31 // pred_fallthru
          _
        %s199 = sand.u32 %s29, 1
        %s200 = scalar_lea.sflag [#allocation3], %s199
        %s201 = sand.u32 %s29, 1
        %s202 = smul.addr %s201, 2
        %s203 = scalar_lea.vmem [#allocation2], %s202
        %p204 = pneg %p42
        %p205 = pneg %p39
        %p206 = pneg %p63
        %p207 = pneg %p60
        %p208 = pneg %p84
        %p209 = pneg %p81
        %p210 = pneg %p110
        %p211 = pneg %p107
        %s212 = sand.u32 %s97, 1
        %s213 = scalar_lea.sflag [#allocation4], %s212
        %s214 = sand.u32 %s97, 1
        %s215 = smul.addr %s214, 2
        %s216 = scalar_lea.vmem [#allocation8], %s215
        %v217 = vld [vmem:[%s183] sm:$0x3]
        %vm218 = vcmask 1041408
        %v219 = vsel %vm218, %v217, 0.0
        %220 = vadd.xlane.f32.xlu0 %v219
        %v221 = vpop.xlane.xlu0 %220
        %v222 = vrot.slane %v221, 4
        %v223 = vadd.f32 %v221, %v222
        %v224 = vrot.slane %v223, 2
        %v225 = vadd.f32 %v223, %v224
        %v226 = vrot.slane %v225, 1
        %v227 = vadd.f32 %v225, %v226
        %v228 = vmul.f32 %v217, %v217
        %v229 = vsel %vm218, %v228, 0.0
        %230 = vadd.xlane.f32.xlu0 %v229
        %v231 = vpop.xlane.xlu0 %230
        %v232 = vrot.slane %v231, 4
        %v233 = vadd.f32 %v231, %v232
        %v234 = vrot.slane %v233, 2
        %v235 = vadd.f32 %v233, %v234
        %v236 = vrot.slane %v235, 1
        %v237 = vadd.f32 %v235, %v236
        %v238 = vmul.f32 %v227, 0.00390625
        %v239 = vmul.f32 %v237, 0.00390625
        %v240 = vmul.f32 %v238, %v238
        %v241 = vsub.f32 %v239, %v240
        %v242 = vmax.f32 %v241, 0.0
        %v243 = vadd.f32 %v242, 1e-12
        %v244 = vrsqrt.pop %v243
        %v245 = vmul.f32 %v244, %v243
        %v246 = vmul.f32 %v245, %v244
        %v247 = vmul.f32 0.5, %v246
        %v248 = vsub.f32 1.5, %v247
        %v249 = vmul.f32 %v244, %v248
        %vm250 = vweird.f32 %v243
        %vm251 = vweird.f32 %v244
        %vm252 = vmor %vm250, %vm251
        %v253 = vsel %vm252, %v244, %v249
        %v254 = vld [vmem:[#allocation5] sm:$0x3]
        %v255 = vmul.f32 %v254, %v253
        %v256 = vld [vmem:[#allocation7] sm:$0x3]
        %v257 = vmul.f32 %v238, %v255
        %v258 = vsub.f32 %v256, %v257
        %v259 = vmul.f32 %v217, %v255
        %v260 = vadd.f32 %v259, %v258
        %261 = vst [vmem:[%s216] sm:$0x3] %v260
        %s262 = sand.u32 %s97, 1
        %s263 = scalar_lea.sflag [#allocation4], %s262
        %s264 = sand.u32 %s97, 1
        %s265 = smul.addr %s264, 2
        %s266 = scalar_lea.vmem [#allocation8], %s265
        // Predicated region
        $region45: #{tpu_custom_call.1} parent=31 // pred_check
          %p267 = pneg %p107
        $region46: #{tpu_custom_call.1} parent=31 // pred_check_branch
          %269 = sbr.rel (%p267) target = $region48
        $region47: #{tpu_custom_call.1} parent=31 // pred_region
          %271 = vsyncadd %s263, 0
          %s272 = smul.addr %s21, 2
          %s273 = scalar_lea.hbm %s3, %s272
          %s275 = sshll.u32 %s266, 4
          %s276 = int_to_ptr.vmem [resolvable:$true] %s275
          %s277 = sshll.u32 %s273, 4
          %s278 = int_to_ptr.hbm [resolvable:$true] %s277
          %280 = dma.vmem_to_hbm [thread:$0]  %s276, 32, %s278, %s263
        $region48: #{tpu_custom_call.1} parent=31 // pred_fallthru
          _
      $region32: #{tpu_custom_call.1} parent=5 // pred_fallthru
        _
      %p281 = scmp.le.s32.totalorder 2, %s16
      // Predicated region
      $region49: #{tpu_custom_call.1} parent=5 // pred_check
        %p282 = pneg %p281
      $region50: #{tpu_custom_call.1} parent=5 // pred_check_branch
        %284 = sbr.rel (%p282) target = $region52
      $region51: #{tpu_custom_call.1} parent=5 // pred_region
        %s285 = ssub.s32 %s16, 2
        // Predicated region
        $region53: #{tpu_custom_call.1} parent=51 // pred_check
          %p286 = pneg %p113
        $region54: #{tpu_custom_call.1} parent=51 // pred_check_branch
          %288 = sbr.rel (%p286) target = $region56
        $region55: #{tpu_custom_call.1} parent=51 // pred_region
          %s289 = sand.u32 %s98, 1
          %s290 = scalar_lea.sflag [#allocation4], %s289
          %s291 = sand.u32 %s98, 1
          %s292 = smul.addr %s291, 2
          %s293 = scalar_lea.vmem [#allocation8], %s292
          %295 = dma.done %s290, 32
        $region56: #{tpu_custom_call.1} parent=51 // pred_fallthru
          _
      $region52: #{tpu_custom_call.1} parent=5 // pred_fallthru
        _
    $region6: #{tpu_custom_call.1} parent=1 // loop_footer
      %s20 = sadd.s32 1, %s16
    $region7: #{tpu_custom_call.1} parent=1 // loop_footer_branch
      %15 = sbr.rel target = $region3
    $region8: #{tpu_custom_call.1} parent=1 // loop_exit
      _
    %296 = vsyncpa [#allocation3], 1
    %s297 = scalar_lea.sflag [#allocation3], 1
    %298 = vsyncpa %s297, 1
    %299 = vsyncpa [#allocation6], 1
    %300 = vsyncpa [#allocation4], 1
    %s301 = scalar_lea.sflag [#allocation4], 1
    %302 = vsyncpa %s301, 1

</llo_original>
